<compile_context>
chip_gen: v6e
topology: v6e:2x2x1
jax: 0.10.0
libtpu: 0.0.40
codegen_flags: <defaults>
</compile_context>

<pallas_src>
import functools

import jax
import jax.numpy as jnp
from jax.experimental import pallas as pl
from jax.experimental.pallas import tpu as pltpu


def _round_up(x, m):
    return ((x + m - 1) // m) * m


def _prod(shape):
    out = 1
    for s in shape:
        out *= int(s)
    return out


# ----------------------------------------------------------------------------
# Pallas kernel 1: fused MLP forward   y = relu(x @ W1^T + b1) @ W2^T + b2
# Weights arrive already transposed AND feature-padded to 128 lanes:
#   w1t (in_f, hidden_p), b1 (1, hidden_p), w2t (hidden_p, out_p), b2 (1, out_p)
# Hidden activation stays in VMEM / vregs — never written to HBM.  Output is
# a lane-dense (B, out_p) store; the caller slices off the padding.
# ----------------------------------------------------------------------------
def _fused_mlp_kernel(x_ref, w1t_ref, b1_ref, w2t_ref, b2_ref, o_ref):
    h = jnp.dot(x_ref[...], w1t_ref[...], preferred_element_type=jnp.float32)
    h = jnp.maximum(h + b1_ref[...], 0.0)
    y = jnp.dot(h, w2t_ref[...], preferred_element_type=jnp.float32)
    o_ref[...] = (y + b2_ref[...]).astype(o_ref.dtype)


def pallas_mlp_forward(x, w1t, b1_2d, w2t, b2_2d):
    """x: (B, in_f); w1t: (in_f, hidden_p); b1_2d: (1, hidden_p);
    w2t: (hidden_p, out_p); b2_2d: (1, out_p).  Returns (B, out_p)."""
    B, in_f = x.shape
    hidden_p = w1t.shape[1]
    out_p = w2t.shape[1]
    return pl.pallas_call(
        _fused_mlp_kernel,
        out_shape=jax.ShapeDtypeStruct((B, out_p), x.dtype),
        grid=(1,),
        in_specs=[
            pl.BlockSpec((B, in_f), lambda i: (0, 0)),
            pl.BlockSpec((in_f, hidden_p), lambda i: (0, 0)),
            pl.BlockSpec((1, hidden_p), lambda i: (0, 0)),
            pl.BlockSpec((hidden_p, out_p), lambda i: (0, 0)),
            pl.BlockSpec((1, out_p), lambda i: (0, 0)),
        ],
        out_specs=pl.BlockSpec((B, out_p), lambda i: (0, 0)),
        compiler_params=pltpu.CompilerParams(
            dimension_semantics=("arbitrary",)),
        # TODO(synk): at real sizes, switch to (M, N, K) tiling with an f32
        # VMEM accumulator + pl.when init/finalize and
        # dimension_semantics=("parallel","parallel","arbitrary");
        # tn/tk multiples of 256 on v6e/v7x, 128 on v5e.
        # TODO(synk): cast weights/activations to bf16 at init on v6e/v7x for
        # MXU throughput (kept f32 here so the exact-reference check holds).
    )(x, w1t, b1_2d, w2t, b2_2d)


# ----------------------------------------------------------------------------
# Pallas kernel 2: bucketed DDP gradient synchronization
#   equivalent of  (param.grad /= world_size) + all_reduce(SUM)  ==  mean.
#   Input is a pre-packed lane-dense (world, padded_rows, 128) slab.
#
# Two variants:
#   * full-rank block (small world): one (world, tile_rows, 128) block per
#     step, unrolled per-rank VPU add chain (world <= ~11 here, so a serial
#     chain is fine; a 2-4-way tree split only matters for much larger world).
#   * rank-in-grid (large world): rank axis is the innermost ("arbitrary")
#     grid axis with an f32 VMEM accumulator; per-step VMEM is
#     world-independent so row tiles stay large on every chip generation.
# ----------------------------------------------------------------------------
def _grad_sync_full_rank_kernel(g_ref, o_ref, *, world, inv_world):
    acc = g_ref[0].astype(jnp.float32)
    for r in range(1, world):                 # static unroll: VALU adds
        acc = acc + g_ref[r].astype(jnp.float32)
    o_ref[...] = (acc * inv_world).astype(o_ref.dtype)


def _grad_sync_rank_grid_kernel(g_ref, o_ref, acc_ref, *, inv_world):
    r = pl.program_id(1)

    @pl.when(r == 0)
    def _():
        acc_ref[...] = jnp.zeros_like(acc_ref)

    acc_ref[...] += g_ref[0].astype(jnp.float32)

    @pl.when(r == pl.num_programs(1) - 1)
    def _():
        o_ref[...] = (acc_ref[...] * inv_world).astype(o_ref.dtype)


_SUBLANE_FLOOR = {4: 8, 2: 16, 1: 32}     # dtype-dependent sublane minimum


def _vmem_buffer_budget_bytes():
    # Budget for the double-buffered pipeline tiles.  Conservative enough for
    # v7x (64 MiB physical per TC) and under the scoped limit we request.
    try:
        cap = int(pltpu.get_tpu_info().vmem_capacity_bytes)
    except Exception:                     # pragma: no cover - chip-info fallback
        cap = 64 << 20                    # assume the smallest (v7x per-TC)
    return min(cap // 2, 24 << 20)


def _plan_grad_sync(total_elems, world, itemsize):
    """Returns (tile_rows, padded_rows, rank_in_grid) for the sync kernel."""
    sub = _SUBLANE_FLOOR.get(itemsize, 8)
    rows = pl.cdiv(total_elems, 128)
    bytes_per_row = 128 * itemsize
    budget = _vmem_buffer_budget_bytes()

    # tile_rows if the whole rank axis is a single block (double-buffered
    # input + output):
    tile_full_rank = budget // ((2 * world + 2) * bytes_per_row)
    # tile_rows with the rank axis in the grid (world-independent VMEM):
    tile_rank_grid = budget // (4 * bytes_per_row + 4 * 128)

    MAX_TILE = 4096
    SMALL_ROWS = 512

    # Prefer the unrolled-chain variant while it still allows a
    # roofline-friendly row tile; otherwise grid the rank axis.
    rank_in_grid = tile_full_rank < min(2048, max(rows, sub))
    tile_rows = tile_rank_grid if rank_in_grid else tile_full_rank
    tile_rows = max(sub, min(tile_rows, MAX_TILE))
    tile_rows = (tile_rows // sub) * sub

    if rows <= SMALL_ROWS and rows <= tile_rows:
        # Small-bucket fast path: one grid step covering all rows.
        tile_rows = _round_up(rows, sub)
    else:
        # >= 2 (even) row tiles so both v7x TensorCores get balanced work.
        n_tiles = max(2, pl.cdiv(rows, tile_rows))
        if n_tiles < 8 and n_tiles % 2:
            n_tiles += 1
        tile_rows = min(tile_rows, _round_up(pl.cdiv(rows, n_tiles), sub))

    padded_rows = _round_up(rows, tile_rows)
    return tile_rows, padded_rows, rank_in_grid


def ddp_bucket_sync(bucket, *, tile_rows, rank_in_grid):
    """bucket: (world, padded_rows, 128) lane-dense slab of per-rank grads.
    Returns the (padded_rows, 128) mean-over-ranks slab."""
    world, padded_rows, lanes = bucket.shape
    assert lanes == 128 and padded_rows % tile_rows == 0
    itemsize = bucket.dtype.itemsize
    inv_world = 1.0 / world
    num_row_tiles = padded_rows // tile_rows
    row_tile_bytes = tile_rows * 128 * itemsize

    if rank_in_grid:
        kernel = functools.partial(_grad_sync_rank_grid_kernel,
                                   inv_world=inv_world)
        grid = (num_row_tiles, world)
        in_specs = [pl.BlockSpec((1, tile_rows, 128), lambda i, r: (r, i, 0))]
        out_specs = pl.BlockSpec((tile_rows, 128), lambda i, r: (i, 0))
        scratch = [pltpu.VMEM((tile_rows, 128), jnp.float32)]
        semantics = ("parallel", "arbitrary")
        vmem_needed = 4 * row_tile_bytes + tile_rows * 128 * 4
    else:
        kernel = functools.partial(_grad_sync_full_rank_kernel,
                                   world=world, inv_world=inv_world)
        grid = (num_row_tiles,)
        in_specs = [pl.BlockSpec((world, tile_rows, 128), lambda i: (0, i, 0))]
        out_specs = pl.BlockSpec((tile_rows, 128), lambda i: (i, 0))
        scratch = []
        semantics = ("parallel",)
        vmem_needed = (2 * world + 2) * row_tile_bytes

    vmem_limit = int(min(max(vmem_needed * 5 // 4 + (2 << 20), 16 << 20),
                         48 << 20))

    return pl.pallas_call(
        kernel,
        out_shape=jax.ShapeDtypeStruct((padded_rows, 128), bucket.dtype),
        grid=grid,
        in_specs=in_specs,
        out_specs=out_specs,
        scratch_shapes=scratch,
        compiler_params=pltpu.CompilerParams(
            dimension_semantics=semantics,
            vmem_limit_bytes=vmem_limit),
    )(bucket)


# ----------------------------------------------------------------------------
# DDP wrapper around a small MLP module
# ----------------------------------------------------------------------------
class DDPMlp:
    """JAX analog of DDP(nn.Sequential(Linear, ReLU, Linear)).

    Parameters are "broadcast from rank 0" by construction: the same
    deterministic init is used everywhere (single-process synthetic setup).
    """

    def __init__(self, key, in_f, hidden, out_f, world_size=4):
        k1, k2, k3, k4 = jax.random.split(key, 4)
        # PyTorch nn.Linear convention: weight (out, in), bias (out,)
        self.w1 = (jax.random.normal(k1, (hidden, in_f), jnp.float32)
                   * (1.0 / jnp.sqrt(in_f)))
        self.b1 = jax.random.normal(k2, (hidden,), jnp.float32) * 0.01
        self.w2 = (jax.random.normal(k3, (out_f, hidden), jnp.float32)
                   * (1.0 / jnp.sqrt(hidden)))
        self.b2 = jax.random.normal(k4, (out_f,), jnp.float32) * 0.01
        self.in_f, self.hidden, self.out_f = in_f, hidden, out_f
        self.world_size = world_size

        # Pre-transpose ONCE and zero-pad hidden/out feature dims to 128 so
        # both matmuls and the output store are lane-dense (unmasked vst).
        # (Padding in_f is unnecessary: K < one MXU tile either way, and it
        # would add a per-forward pad of x.)
        hidden_p = _round_up(hidden, 128)
        out_p = _round_up(out_f, 128)
        self.hidden_p, self.out_p = hidden_p, out_p
        self.w1t_p = jnp.pad(self.w1.T, ((0, 0), (0, hidden_p - hidden)))
        self.b1_p = jnp.pad(self.b1, (0, hidden_p - hidden)).reshape(1, hidden_p)
        self.w2t_p = jnp.pad(self.w2.T,
                             ((0, hidden_p - hidden), (0, out_p - out_f)))
        self.b2_p = jnp.pad(self.b2, (0, out_p - out_f)).reshape(1, out_p)

        # Gradient-bucket layout (fixed by the module's parameters, computed
        # once — analogous to DDP's bucket assignment at construction).
        param_shapes = {"w1": (hidden, in_f), "b1": (hidden,),
                        "w2": (out_f, hidden), "b2": (out_f,)}
        self._names = list(param_shapes)
        self._shapes = [param_shapes[n] for n in self._names]
        self._sizes = [_prod(s) for s in self._shapes]
        self._total = sum(self._sizes)
        self._tile_rows, self._padded_rows, self._rank_in_grid = \
            _plan_grad_sync(self._total, world_size, 4)
        self._padded_total = self._padded_rows * 128
        # TODO(synk): async_op=True overlap of the grad all-reduce with the
        # remaining backward pass has no single-device Pallas equivalent; the
        # bucketed reduction math itself is implemented in ddp_bucket_sync.

    def forward(self, x):
        # forward == wrapped module forward (DDP adds nothing to forward).
        y_p = pallas_mlp_forward(x, self.w1t_p, self.b1_p,
                                 self.w2t_p, self.b2_p)
        return y_p[:, :self.out_f]

    def pack_grad_bucket(self, grads_per_rank):
        """One-time packing of per-rank grads into the lane-dense slab.
        In a real DDP the per-parameter gradients would be views into this
        slab (or aliased via input_output_aliases), so the sync path never
        pays an extra HBM pass for bucketing."""
        world = self.world_size
        parts = [grads_per_rank[n].reshape(world, -1) for n in self._names]
        flat = jnp.concatenate(parts, axis=1)
        pad = self._padded_total - self._total
        if pad:
            flat = jnp.pad(flat, ((0, 0), (0, pad)))
        return flat.reshape(world, self._padded_rows, 128)

    def finish_gradient_synchronization(self, bucket):
        """bucket: (world, padded_rows, 128). Returns dict name -> mean grad."""
        reduced = ddp_bucket_sync(bucket, tile_rows=self._tile_rows,
                                  rank_in_grid=self._rank_in_grid)
        flat = reduced.reshape(-1)
        out, off = {}, 0
        for n, shp, sz in zip(self._names, self._shapes, self._sizes):
            out[n] = flat[off:off + sz].reshape(shp)
            off += sz
        return out


# ----------------------------------------------------------------------------
if __name__ == "__main__":
    key = jax.random.PRNGKey(0)
    (k_param, k_x, k_g1, k_g2, k_g3, k_g4, k_g5) = jax.random.split(key, 7)

    B, IN_F, HIDDEN, OUT_F = 8, 32, 64, 32
    WORLD = 4

    model = DDPMlp(k_param, IN_F, HIDDEN, OUT_F, world_size=WORLD)

    x = jax.random.normal(k_x, (B, IN_F), jnp.float32)

    # Forward pass through the DDP-wrapped module (single fused Pallas kernel).
    y = model.forward(x)
    y = jax.block_until_ready(y)

    # Reference check for the forward pass.
    h_ref = jnp.maximum(x @ model.w1.T + model.b1, 0.0)
    y_ref = h_ref @ model.w2.T + model.b2
    assert y.shape == y_ref.shape, "forward shape mismatch"
    assert jnp.allclose(y, y_ref, atol=1e-5, rtol=1e-5), "forward mismatch"

    # Gradient synchronization path: simulate per-rank gradients for every
    # parameter, pack them once into the lane-dense bucket, and average with
    # the tiled Pallas reduction.
    grads_per_rank = {
        "w1": jax.random.normal(k_g1, (WORLD, HIDDEN, IN_F), jnp.float32),
        "b1": jax.random.normal(k_g2, (WORLD, HIDDEN), jnp.float32),
        "w2": jax.random.normal(k_g3, (WORLD, OUT_F, HIDDEN), jnp.float32),
        "b2": jax.random.normal(k_g4, (WORLD, OUT_F), jnp.float32),
    }
    bucket = model.pack_grad_bucket(grads_per_rank)
    synced = model.finish_gradient_synchronization(bucket)
    synced = {k: jax.block_until_ready(v) for k, v in synced.items()}

    for name, g in grads_per_rank.items():
        ref = g.mean(axis=0)
        assert synced[name].shape == ref.shape, f"shape mismatch for {name}"
        assert jnp.allclose(synced[name], ref, atol=1e-5, rtol=1e-5), \
            f"grad sync mismatch for {name}"

    # Also exercise the large-world variant (rank axis in the grid with an
    # f32 accumulator) at small shapes to verify both code paths.
    g_test = jax.random.normal(k_g5, (WORLD, 16, 128), jnp.float32)
    out_rg = ddp_bucket_sync(g_test, tile_rows=8, rank_in_grid=True)
    out_rg = jax.block_until_ready(out_rg)
    assert jnp.allclose(out_rg, g_test.mean(axis=0), atol=1e-5, rtol=1e-5), \
        "rank-in-grid sync mismatch"

    print("KERNEL_OK")
</pallas_src>

<mosaic_0001>
module attributes {stable_mosaic.version = 11 : i64} {
  func.func @_fused_mlp_kernel(%arg0: i32, %arg1: memref<8x32xf32, #tpu.memory_space<vmem>>, %arg2: memref<32x128xf32, #tpu.memory_space<vmem>>, %arg3: memref<1x128xf32, #tpu.memory_space<vmem>>, %arg4: memref<128x128xf32, #tpu.memory_space<vmem>>, %arg5: memref<1x128xf32, #tpu.memory_space<vmem>>, %arg6: memref<8x128xf32, #tpu.memory_space<vmem>>) attributes {dimension_semantics = [#tpu.dimension_semantics<arbitrary>], iteration_bounds = array<i64: 1>, scalar_prefetch = 0 : i64, scratch_operands = 0 : i64, tpu.core_type = #tpu.core_type<tc>, window_params = [{pipeline_mode = #tpu.pipeline_mode<synchronous>, transform_indices = @transform_0, window_bounds = array<i64: 8, 32>}, {pipeline_mode = #tpu.pipeline_mode<synchronous>, transform_indices = @transform_1, window_bounds = array<i64: 32, 128>}, {pipeline_mode = #tpu.pipeline_mode<synchronous>, transform_indices = @transform_2, window_bounds = array<i64: 1, 128>}, {pipeline_mode = #tpu.pipeline_mode<synchronous>, transform_indices = @transform_3, window_bounds = array<i64: 128, 128>}, {pipeline_mode = #tpu.pipeline_mode<synchronous>, transform_indices = @transform_4, window_bounds = array<i64: 1, 128>}, {pipeline_mode = #tpu.pipeline_mode<synchronous>, transform_indices = @transform_5, window_bounds = array<i64: 8, 128>}]} {
    %c0 = arith.constant 0 : index
    %c0_0 = arith.constant 0 : index
    %0 = vector.load %arg1[%c0, %c0_0] : memref<8x32xf32, #tpu.memory_space<vmem>>, vector<8x32xf32>
    %c0_1 = arith.constant 0 : index
    %c0_2 = arith.constant 0 : index
    %1 = vector.load %arg2[%c0_1, %c0_2] : memref<32x128xf32, #tpu.memory_space<vmem>>, vector<32x128xf32>
    %cst = arith.constant dense<0.000000e+00> : vector<8x128xf32>
    %2 = tpu.matmul %0, %1, %cst {dimension_numbers = #tpu.dot_dimension_numbers<[1], [0], [0], [1], [0, 0, 1, 1], [], []>} : vector<8x32xf32>, vector<32x128xf32>, vector<8x128xf32> -> vector<8x128xf32>
    %c0_3 = arith.constant 0 : index
    %c0_4 = arith.constant 0 : index
    %3 = vector.load %arg3[%c0_3, %c0_4] : memref<1x128xf32, #tpu.memory_space<vmem>>, vector<1x128xf32>
    %4 = vector.broadcast %3 : vector<1x128xf32> to vector<8x128xf32>
    %5 = arith.addf %2, %4 : vector<8x128xf32>
    %cst_5 = arith.constant 0.000000e+00 : f32
    %6 = vector.broadcast %cst_5 : f32 to vector<8x128xf32>
    %7 = arith.maximumf %5, %6 : vector<8x128xf32>
    %c0_6 = arith.constant 0 : index
    %c0_7 = arith.constant 0 : index
    %8 = vector.load %arg4[%c0_6, %c0_7] : memref<128x128xf32, #tpu.memory_space<vmem>>, vector<128x128xf32>
    %cst_8 = arith.constant dense<0.000000e+00> : vector<8x128xf32>
    %9 = tpu.matmul %7, %8, %cst_8 {dimension_numbers = #tpu.dot_dimension_numbers<[1], [0], [0], [1], [0, 0, 1, 1], [], []>} : vector<8x128xf32>, vector<128x128xf32>, vector<8x128xf32> -> vector<8x128xf32>
    %c0_9 = arith.constant 0 : index
    %c0_10 = arith.constant 0 : index
    %10 = vector.load %arg5[%c0_9, %c0_10] : memref<1x128xf32, #tpu.memory_space<vmem>>, vector<1x128xf32>
    %11 = vector.broadcast %10 : vector<1x128xf32> to vector<8x128xf32>
    %12 = arith.addf %9, %11 : vector<8x128xf32>
    %c0_11 = arith.constant 0 : index
    %c0_12 = arith.constant 0 : index
    %13 = vector.load %arg6[%c0_11, %c0_12] : memref<8x128xf32, #tpu.memory_space<vmem>>, vector<8x128xf32>
    tpu.vector_store %arg6[%c0_11, %c0_12], %12 {strides = array<i32>} : memref<8x128xf32, #tpu.memory_space<vmem>>, vector<8x128xf32>,
    return
  }
  func.func @transform_0(%arg0: i32) -> (i32, i32) {
    %c0_i32 = arith.constant 0 : i32
    %c0_i32_0 = arith.constant 0 : i32
    %c0_i32_1 = arith.constant 0 : i32
    return %c0_i32, %c0_i32_0 : i32, i32
  }
  func.func @transform_1(%arg0: i32) -> (i32, i32) {
    %c0_i32 = arith.constant 0 : i32
    %c0_i32_0 = arith.constant 0 : i32
    %c0_i32_1 = arith.constant 0 : i32
    return %c0_i32, %c0_i32_0 : i32, i32
  }
  func.func @transform_2(%arg0: i32) -> (i32, i32) {
    %c0_i32 = arith.constant 0 : i32
    %c0_i32_0 = arith.constant 0 : i32
    %c0_i32_1 = arith.constant 0 : i32
    return %c0_i32, %c0_i32_0 : i32, i32
  }
  func.func @transform_3(%arg0: i32) -> (i32, i32) {
    %c0_i32 = arith.constant 0 : i32
    %c0_i32_0 = arith.constant 0 : i32
    %c0_i32_1 = arith.constant 0 : i32
    return %c0_i32, %c0_i32_0 : i32, i32
  }
  func.func @transform_4(%arg0: i32) -> (i32, i32) {
    %c0_i32 = arith.constant 0 : i32
    %c0_i32_0 = arith.constant 0 : i32
    %c0_i32_1 = arith.constant 0 : i32
    return %c0_i32, %c0_i32_0 : i32, i32
  }
  func.func @transform_5(%arg0: i32) -> (i32, i32) {
    %c0_i32 = arith.constant 0 : i32
    %c0_i32_0 = arith.constant 0 : i32
    %c0_i32_1 = arith.constant 0 : i32
    return %c0_i32, %c0_i32_0 : i32, i32
  }
}

</mosaic_0001>

<llo_original>
// kernel: tpu_custom_call.1
$region0: #{tpu_custom_call.1}
  #allocation0 [shape = 'u32[]', space=smem, size = 0x4, offset = 0x4, fixed_abs, tag = 'smem constant byte address 0x4 - core index']
  #allocation1 [shape = 'u32[144,128]{1,0:T(1,128)}', space=vmem, size = 0x12000, scoped, tag = 'internal scratch']
  %s0 = inlined_call_operand.hbm [shape: f32[8,32], index: 0, kind: input, shape index: {}]
  %s1 = inlined_call_operand.hbm [shape: f32[32,128], index: 1, kind: input, shape index: {}]
  %s2 = inlined_call_operand.vmem [shape: f32[1,128], index: 2, kind: input, shape index: {}]
  %s3 = inlined_call_operand.hbm [shape: f32[128,128], index: 3, kind: input, shape index: {}]
  %s4 = inlined_call_operand.vmem [shape: f32[1,128], index: 4, kind: input, shape index: {}]
  %s5 = inlined_call_operand.hbm [shape: f32[8,128], index: 5, kind: output, shape index: {}]
  %s6 = sld [smem:[#allocation0]]
  $region42: #{tpu_custom_call.1} parent=0
    _
  %s8 = ssub.s32 1, %s6
  %s9 = scalar_select 0, %s8, %s6
  $region1: #{tpu_custom_call.1} parent=0
    #allocation2 [shape = 'u8[4096]{0}', space=vmem, size = 0x1000, scoped, tag = 'input window, operand 0, single buffered']
    #allocation3 [shape = 's32[1]{0}', space=sflag, size = 0x4, scoped, tag = 'scoped memory for tpu_custom_call.1']
    #allocation4 [shape = 's32[1]{0}', space=sflag, size = 0x4, scoped, tag = 'scoped memory for tpu_custom_call.1']
    #allocation5 [shape = 'u8[16384]{0}', space=vmem, size = 0x4000, scoped, tag = 'input window, operand 1, single buffered']
    #allocation6 [shape = 's32[1]{0}', space=sflag, size = 0x4, scoped, tag = 'scoped memory for tpu_custom_call.1']
    #allocation7 [shape = 'u8[65536]{0}', space=vmem, size = 0x10000, scoped, tag = 'input window, operand 3, single buffered']
    #allocation8 [shape = 'u8[4096]{0}', space=vmem, size = 0x1000, scoped, tag = 'output window, operand 0, single buffered']
    %10 = vsyncpa [#allocation3], 0
    %11 = vsyncpa [#allocation6], 0
    %12 = vsyncpa [#allocation4], 0
    // Predicated region
    $region2: #{tpu_custom_call.1} parent=1 // pred_check
      _
    $region3: #{tpu_custom_call.1} parent=1 // pred_check_branch
      %14 = sbr.rel (0) target = $region5
    $region4: #{tpu_custom_call.1} parent=1 // pred_region
      %s16 = ssub.s32 128, 128
      %17 = vsyncadd [#allocation3], %s16
      %s19 = sshll.u32 [#allocation2], 4
      %s20 = int_to_ptr.vmem [resolvable:$true] %s19
      %22 = dma.hbm_to_vmem [thread:$0]  %s0, 128, %s20, [#allocation3]
    $region5: #{tpu_custom_call.1} parent=1 // pred_fallthru
      _
    // Predicated region
    $region6: #{tpu_custom_call.1} parent=1 // pred_check
      _
    $region7: #{tpu_custom_call.1} parent=1 // pred_check_branch
      %24 = sbr.rel (0) target = $region9
    $region8: #{tpu_custom_call.1} parent=1 // pred_region
      %s26 = ssub.s32 512, 512
      %27 = vsyncadd [#allocation6], %s26
      %s28 = sshll.u32 [#allocation5], 4
      %s29 = int_to_ptr.vmem [resolvable:$true] %s28
      %34 = dma.hbm_to_vmem [thread:$0]  %s1, 512, %s29, [#allocation6], 128, 128, 8
    $region9: #{tpu_custom_call.1} parent=1 // pred_fallthru
      _
    // Predicated region
    $region10: #{tpu_custom_call.1} parent=1 // pred_check
      _
    $region11: #{tpu_custom_call.1} parent=1 // pred_check_branch
      %36 = sbr.rel (0) target = $region13
    $region12: #{tpu_custom_call.1} parent=1 // pred_region
      _
    $region13: #{tpu_custom_call.1} parent=1 // pred_fallthru
      _
    // Predicated region
    $region14: #{tpu_custom_call.1} parent=1 // pred_check
      _
    $region15: #{tpu_custom_call.1} parent=1 // pred_check_branch
      %38 = sbr.rel (0) target = $region17
    $region16: #{tpu_custom_call.1} parent=1 // pred_region
      %s40 = ssub.s32 2048, 2048
      %41 = vsyncadd [#allocation6], %s40
      %s42 = sshll.u32 [#allocation7], 4
      %s43 = int_to_ptr.vmem [resolvable:$true] %s42
      %48 = dma.hbm_to_vmem [thread:$0]  %s3, 2048, %s43, [#allocation6], 128, 128, 8
    $region17: #{tpu_custom_call.1} parent=1 // pred_fallthru
      _
    // Predicated region
    $region18: #{tpu_custom_call.1} parent=1 // pred_check
      _
    $region19: #{tpu_custom_call.1} parent=1 // pred_check_branch
      %50 = sbr.rel (0) target = $region21
    $region20: #{tpu_custom_call.1} parent=1 // pred_region
      _
    $region21: #{tpu_custom_call.1} parent=1 // pred_fallthru
      _
    // Predicated region
    $region22: #{tpu_custom_call.1} parent=1 // pred_check
      _
    $region23: #{tpu_custom_call.1} parent=1 // pred_check_branch
      %52 = sbr.rel (0) target = $region25
    $region24: #{tpu_custom_call.1} parent=1 // pred_region
      %53 = dma.done [#allocation3], 128
    $region25: #{tpu_custom_call.1} parent=1 // pred_fallthru
      _
    // Predicated region
    $region26: #{tpu_custom_call.1} parent=1 // pred_check
      _
    $region27: #{tpu_custom_call.1} parent=1 // pred_check_branch
      %55 = sbr.rel (0) target = $region29
    $region28: #{tpu_custom_call.1} parent=1 // pred_region
      %56 = dma.done [#allocation6], 512
    $region29: #{tpu_custom_call.1} parent=1 // pred_fallthru
      _
    // Predicated region
    $region30: #{tpu_custom_call.1} parent=1 // pred_check
      _
    $region31: #{tpu_custom_call.1} parent=1 // pred_check_branch
      %58 = sbr.rel (0) target = $region33
    $region32: #{tpu_custom_call.1} parent=1 // pred_region
      %59 = dma.done [#allocation6], 2048
    $region33: #{tpu_custom_call.1} parent=1 // pred_fallthru
      _
    %v60 = vld [vmem:[#allocation2] sm:$0xff]
    %v61 = vld [vmem:[#allocation5] sm:$0xff]
    %v62 = vld [vmem:[#allocation5 + $0x8] sm:$0xff]
    %v63 = vld [vmem:[#allocation5 + $0x10] sm:$0xff]
    %v64 = vld [vmem:[#allocation5 + $0x18] sm:$0xff]
    %v65 = vld [vmem:[%s2] sm:$0x1]
    %v67 = vlaneseq
    %v68 = vshrl.u32 %v67, 7
    %v69 = vsub.s32 0, %v68
    %v70 = vrot.slane %v65, %v69
    %vm72 = vcmask 261120
    %v74 = vsel %vm72, %v60, 0
    %76 = vmatprep.subr.mxu0 0.0
    %77 = vmatpush1.msra.mxu0 0.0
    %78 = vmatprep.subr.mxu0 0.0
    %79 = vmatpush1.msra.mxu0 0.0
    %80 = vmatprep.subr.mxu0 0.0
    %81 = vmatpush1.msra.mxu0 0.0
    %82 = vmatprep.subr.mxu0 0.0
    %83 = vmatpush1.msra.mxu0 0.0
    %84 = vmatprep.subr.mxu0 0.0
    %85 = vmatpush1.msra.mxu0 0.0
    %86 = vmatprep.subr.mxu0 0.0
    %87 = vmatpush1.msra.mxu0 0.0
    %88 = vmatprep.subr.mxu0 0.0
    %89 = vmatpush1.msra.mxu0 0.0
    %90 = vmatprep.subr.mxu0 0.0
    %91 = vmatpush1.msra.mxu0 0.0
    %92 = vmatprep.subr.mxu0 0.0
    %93 = vmatpush1.msra.mxu0 0.0
    %94 = vmatprep.subr.mxu0 0.0
    %95 = vmatpush1.msra.mxu0 0.0
    %96 = vmatprep.subr.mxu0 0.0
    %97 = vmatpush1.msra.mxu0 0.0
    %98 = vmatprep.subr.mxu0 0.0
    %99 = vmatpush1.msra.mxu0 0.0
    %100 = vmatprep.subr.mxu0 0.0
    %101 = vmatpush1.msra.mxu0 %v64
    %102 = vmatprep.subr.mxu0 0.0
    %103 = vmatpush1.msra.mxu0 %v63
    %104 = vmatprep.subr.mxu0 0.0
    %105 = vmatpush1.msra.mxu0 %v62
    %106 = vmatprep.subr.mxu0 0.0
    %107 = vmatpush1.msra.mxu0 %v61
    %108 = vmatprep.subr.mxu0 0.0
    %109 = vmatpush2.msra.mxu0 0.0
    %110 = vmatprep.subr.mxu0 0.0
    %111 = vmatpush2.msra.mxu0 0.0
    %112 = vmatprep.subr.mxu0 0.0
    %113 = vmatpush2.msra.mxu0 0.0
    %114 = vmatprep.subr.mxu0 0.0
    %115 = vmatpush2.msra.mxu0 0.0
    %116 = vmatprep.subr.mxu0 0.0
    %117 = vmatpush2.msra.mxu0 0.0
    %118 = vmatprep.subr.mxu0 0.0
    %119 = vmatpush2.msra.mxu0 0.0
    %120 = vmatprep.subr.mxu0 0.0
    %121 = vmatpush2.msra.mxu0 0.0
    %122 = vmatprep.subr.mxu0 0.0
    %123 = vmatpush2.msra.mxu0 0.0
    %124 = vmatprep.subr.mxu0 0.0
    %125 = vmatpush2.msra.mxu0 0.0
    %126 = vmatprep.subr.mxu0 0.0
    %127 = vmatpush2.msra.mxu0 0.0
    %128 = vmatprep.subr.mxu0 0.0
    %129 = vmatpush2.msra.mxu0 0.0
    %130 = vmatprep.subr.mxu0 0.0
    %131 = vmatpush2.msra.mxu0 0.0
    %132 = vmatprep.subr.mxu0 0.0
    %133 = vmatpush2.msra.mxu0 0.0
    %134 = vmatprep.subr.mxu0 0.0
    %135 = vmatpush2.msra.mxu0 0.0
    %136 = vmatprep.subr.mxu0 0.0
    %137 = vmatpush2.msra.mxu0 0.0
    %138 = vmatprep.subr.mxu0 0.0
    %139 = vmatpush2.msra.mxu0 0.0
    %140 = vmatprep.mubr.f32.mxu0 0.0
    %141 = vmatmul.mubr.f32.gmra.mxu0 %v74
    %v142 = vpop.f32.mrf.mxu0
    %v143 = vadd.f32 %v70, %v142
    %v144 = vpop.f32.mrf.mxu0
    %145 = vdwg.mxu0
    %v146 = vmax.f32 %v143, 0.0
    %v147 = vld [vmem:[#allocation7] sm:$0xff]
    %v148 = vld [vmem:[#allocation7 + $0x8] sm:$0xff]
    %v149 = vld [vmem:[#allocation7 + $0x10] sm:$0xff]
    %v150 = vld [vmem:[#allocation7 + $0x18] sm:$0xff]
    %v151 = vld [vmem:[#allocation7 + $0x20] sm:$0xff]
    %v152 = vld [vmem:[#allocation7 + $0x28] sm:$0xff]
    %v153 = vld [vmem:[#allocation7 + $0x30] sm:$0xff]
    %v154 = vld [vmem:[#allocation7 + $0x38] sm:$0xff]
    %v155 = vld [vmem:[#allocation7 + $0x40] sm:$0xff]
    %v156 = vld [vmem:[#allocation7 + $0x48] sm:$0xff]
    %v157 = vld [vmem:[#allocation7 + $0x50] sm:$0xff]
    %v158 = vld [vmem:[#allocation7 + $0x58] sm:$0xff]
    %v159 = vld [vmem:[#allocation7 + $0x60] sm:$0xff]
    %v160 = vld [vmem:[#allocation7 + $0x68] sm:$0xff]
    %v161 = vld [vmem:[#allocation7 + $0x70] sm:$0xff]
    %v162 = vld [vmem:[#allocation7 + $0x78] sm:$0xff]
    %v163 = vld [vmem:[%s4] sm:$0x1]
    %v165 = vlaneseq
    %v166 = vshrl.u32 %v165, 7
    %v167 = vsub.s32 0, %v166
    %v168 = vrot.slane %v163, %v167
    %170 = vmatprep.subr.mxu0 0.0
    %171 = vmatpush1.msra.mxu0 %v162
    %172 = vmatprep.subr.mxu0 0.0
    %173 = vmatpush1.msra.mxu0 %v161
    %174 = vmatprep.subr.mxu0 0.0
    %175 = vmatpush1.msra.mxu0 %v160
    %176 = vmatprep.subr.mxu0 0.0
    %177 = vmatpush1.msra.mxu0 %v159
    %178 = vmatprep.subr.mxu0 0.0
    %179 = vmatpush1.msra.mxu0 %v158
    %180 = vmatprep.subr.mxu0 0.0
    %181 = vmatpush1.msra.mxu0 %v157
    %182 = vmatprep.subr.mxu0 0.0
    %183 = vmatpush1.msra.mxu0 %v156
    %184 = vmatprep.subr.mxu0 0.0
    %185 = vmatpush1.msra.mxu0 %v155
    %186 = vmatprep.subr.mxu0 0.0
    %187 = vmatpush1.msra.mxu0 %v154
    %188 = vmatprep.subr.mxu0 0.0
    %189 = vmatpush1.msra.mxu0 %v153
    %190 = vmatprep.subr.mxu0 0.0
    %191 = vmatpush1.msra.mxu0 %v152
    %192 = vmatprep.subr.mxu0 0.0
    %193 = vmatpush1.msra.mxu0 %v151
    %194 = vmatprep.subr.mxu0 0.0
    %195 = vmatpush1.msra.mxu0 %v150
    %196 = vmatprep.subr.mxu0 0.0
    %197 = vmatpush1.msra.mxu0 %v149
    %198 = vmatprep.subr.mxu0 0.0
    %199 = vmatpush1.msra.mxu0 %v148
    %200 = vmatprep.subr.mxu0 0.0
    %201 = vmatpush1.msra.mxu0 %v147
    %202 = vmatprep.subr.mxu0 0.0
    %203 = vmatpush2.msra.mxu0 0.0
    %204 = vmatprep.subr.mxu0 0.0
    %205 = vmatpush2.msra.mxu0 0.0
    %206 = vmatprep.subr.mxu0 0.0
    %207 = vmatpush2.msra.mxu0 0.0
    %208 = vmatprep.subr.mxu0 0.0
    %209 = vmatpush2.msra.mxu0 0.0
    %210 = vmatprep.subr.mxu0 0.0
    %211 = vmatpush2.msra.mxu0 0.0
    %212 = vmatprep.subr.mxu0 0.0
    %213 = vmatpush2.msra.mxu0 0.0
    %214 = vmatprep.subr.mxu0 0.0
    %215 = vmatpush2.msra.mxu0 0.0
    %216 = vmatprep.subr.mxu0 0.0
    %217 = vmatpush2.msra.mxu0 0.0
    %218 = vmatprep.subr.mxu0 0.0
    %219 = vmatpush2.msra.mxu0 0.0
    %220 = vmatprep.subr.mxu0 0.0
    %221 = vmatpush2.msra.mxu0 0.0
    %222 = vmatprep.subr.mxu0 0.0
    %223 = vmatpush2.msra.mxu0 0.0
    %224 = vmatprep.subr.mxu0 0.0
    %225 = vmatpush2.msra.mxu0 0.0
    %226 = vmatprep.subr.mxu0 0.0
    %227 = vmatpush2.msra.mxu0 0.0
    %228 = vmatprep.subr.mxu0 0.0
    %229 = vmatpush2.msra.mxu0 0.0
    %230 = vmatprep.subr.mxu0 0.0
    %231 = vmatpush2.msra.mxu0 0.0
    %232 = vmatprep.subr.mxu0 0.0
    %233 = vmatpush2.msra.mxu0 0.0
    %234 = vmatprep.mubr.f32.mxu0 0.0
    %235 = vmatmul.mubr.f32.gmra.mxu0 %v146
    %v236 = vpop.f32.mrf.mxu0
    %v237 = vadd.f32 %v168, %v236
    %v238 = vpop.f32.mrf.mxu0
    %239 = vdwg.mxu0
    %240 = vst [vmem:[#allocation8] sm:$0xff] %v237
    // Predicated region
    $region34: #{tpu_custom_call.1} parent=1 // pred_check
      _
    $region35: #{tpu_custom_call.1} parent=1 // pred_check_branch
      %242 = sbr.rel (0) target = $region37
    $region36: #{tpu_custom_call.1} parent=1 // pred_region
      %s244 = ssub.s32 128, 128
      %245 = vsyncadd [#allocation4], %s244
      %s247 = sshll.u32 [#allocation8], 4
      %s248 = int_to_ptr.vmem [resolvable:$true] %s247
      %250 = dma.vmem_to_hbm [thread:$0]  %s248, 128, %s5, [#allocation4]
    $region37: #{tpu_custom_call.1} parent=1 // pred_fallthru
      _
    // Predicated region
    $region38: #{tpu_custom_call.1} parent=1 // pred_check
      _
    $region39: #{tpu_custom_call.1} parent=1 // pred_check_branch
      %252 = sbr.rel (0) target = $region41
    $region40: #{tpu_custom_call.1} parent=1 // pred_region
      %253 = dma.done [#allocation4], 128
    $region41: #{tpu_custom_call.1} parent=1 // pred_fallthru
      _
    %254 = vsyncpa [#allocation3], 1
    %255 = vsyncpa [#allocation6], 1
    %256 = vsyncpa [#allocation4], 1

</llo_original>
